<compile_context>
chip_gen: v7x
topology: tpu7x:2x2x1
jax: 0.10.0
libtpu: 0.0.40
codegen_flags: <defaults>
</compile_context>

<pallas_src>
from functools import partial

import jax
import jax.numpy as jnp
from jax import lax
from jax.experimental import pallas as pl
from jax.experimental.pallas import tpu as pltpu

_LANES = 128
_TILE_BYTES = 2 << 20        # streaming block size (2 MiB per block)
_RESIDENT_BYTES = 4 << 20    # arrays up to this stay in ONE block -> x read from HBM once
_VMEM_LIMIT = 32 * 1024 * 1024


def _pick_block_rows(rows, cols):
    """Rows per block for a (rows, cols) f32 slab."""
    bytes_per_row = cols * 4
    if rows * bytes_per_row <= _RESIDENT_BYTES:
        return rows                       # single resident block (also exempts (8,128) rule)
    # TODO(synk): also tile the lane dim if a single row exceeds the tile budget.
    block = max(8, (_TILE_BYTES // bytes_per_row) // 8 * 8)
    return min(block, rows)


def _make_fused_kernel(total, rows, block_rows, block_cols):
    """Fused 2-phase kernel: phase 0 = stats reduction, phase 1 = sigmoid(A*x+B)."""
    inv_n = 1.0 / float(total)
    ragged = (rows % block_rows) != 0     # last row-block is partial -> mask it

    def kernel(params_ref, x_ref, o_ref, sum_ref, sumsq_ref, a_ref, b_ref):
        phase = pl.program_id(0)
        tile = pl.program_id(1)

        @pl.when((phase == 0) & (tile == 0))
        def _init():
            sum_ref[...] = jnp.zeros_like(sum_ref)
            sumsq_ref[...] = jnp.zeros_like(sumsq_ref)

        @pl.when(phase == 0)
        def _stats():
            x = x_ref[...]                                        # (block_rows, block_cols)
            if ragged:
                row_ids = lax.broadcasted_iota(jnp.int32, (block_rows, 1), 0)
                valid = (row_ids + tile * block_rows) < rows      # (block_rows, 1)
                x = jnp.where(valid, x, 0.0)
            sum_ref[...] += jnp.sum(x, axis=0, keepdims=True)     # (1, block_cols)
            sumsq_ref[...] += jnp.sum(x * x, axis=0, keepdims=True)

        # Phase boundary: fold scalar algebra once, entirely in-kernel.
        @pl.when((phase == 1) & (tile == 0))
        def _fold():
            w = params_ref[0]
            c = params_ref[1]
            gamma = params_ref[2]
            beta = params_ref[3]
            eps = params_ref[4]
            sum_x = jnp.sum(sum_ref[...], keepdims=True)          # (1, 1)
            sumsq_x = jnp.sum(sumsq_ref[...], keepdims=True)      # (1, 1)
            mean_x = sum_x * inv_n
            var_x = jnp.maximum(sumsq_x * inv_n - mean_x * mean_x, 0.0)
            mean_y = w * mean_x + c
            var_y = (w * w) * var_x
            s = gamma * lax.rsqrt(var_y + eps)                    # EUP
            a = s * w
            b = s * (c - mean_y) + beta
            a_ref[...] = jnp.broadcast_to(a, a_ref.shape)
            b_ref[...] = jnp.broadcast_to(b, b_ref.shape)

        @pl.when(phase == 1)
        def _apply():
            z = a_ref[...] * x_ref[...] + b_ref[...]
            # tanh-form sigmoid -> EUP slot (free under the memory-bound roofline).
            o_ref[...] = 0.5 * (jnp.tanh(0.5 * z) + 1.0)

    return kernel


@partial(jax.jit, static_argnames=("block_rows_override",))
def conv_bn_sigmoid(x_ncl, conv_w, conv_b, bn_gamma, bn_beta, eps=1e-5, *,
                    block_rows_override=None):
    """x_ncl: (N, 1, L) float32.  Returns sigmoid(bn(conv(x))) with batch stats."""
    N, C, L = x_ncl.shape
    total = N * C * L
    x = x_ncl.astype(jnp.float32)

    # Free-view 2D layout (no pad, no output slice):
    #  - lane-dense (total//128, 128) when total % 128 == 0 (unmasked 128-wide stores)
    #  - otherwise the natural (N*C, L) layout; ragged tails handled in-kernel.
    if total % _LANES == 0:
        rows, cols = total // _LANES, _LANES
    else:
        rows, cols = N * C, L
    x2d = x.reshape(rows, cols)

    if block_rows_override is not None:
        block_rows = min(int(block_rows_override), rows)
    else:
        block_rows = _pick_block_rows(rows, cols)
    num_tiles = -(-rows // block_rows)

    params = jnp.stack([
        jnp.asarray(conv_w, jnp.float32),
        jnp.asarray(conv_b, jnp.float32),
        jnp.asarray(bn_gamma, jnp.float32),
        jnp.asarray(bn_beta, jnp.float32),
        jnp.asarray(eps, jnp.float32),
    ])

    out2d = pl.pallas_call(
        _make_fused_kernel(total, rows, block_rows, cols),
        out_shape=jax.ShapeDtypeStruct((rows, cols), jnp.float32),
        grid_spec=pltpu.PrefetchScalarGridSpec(
            num_scalar_prefetch=1,
            grid=(2, num_tiles),                      # (phase, tile)
            in_specs=[pl.BlockSpec((block_rows, cols), lambda p, i, prm: (i, 0))],
            # Output block index stays 0 during phase 0 (nothing written -> nothing
            # flushed); during phase 1 it tracks the tile, so each block is written
            # to HBM exactly once.
            out_specs=pl.BlockSpec((block_rows, cols), lambda p, i, prm: (i * p, 0)),
            scratch_shapes=[pltpu.VMEM((1, cols), jnp.float32)] * 4,  # sum, sumsq, A, B
        ),
        compiler_params=pltpu.CompilerParams(
            # Phase 1 consumes global stats, so both axes must run sequentially.
            dimension_semantics=("arbitrary", "arbitrary"),
            vmem_limit_bytes=_VMEM_LIMIT,
        ),
    )(params, x2d)

    return out2d.reshape(N, C, L)


def _reference(x_ncl, conv_w, conv_b, bn_gamma, bn_beta, eps=1e-5):
    y = conv_w * x_ncl + conv_b
    mean = jnp.mean(y)
    var = jnp.mean((y - mean) ** 2)
    z = bn_gamma * (y - mean) / jnp.sqrt(var + eps) + bn_beta
    return jax.nn.sigmoid(z)


if __name__ == "__main__":
    key = jax.random.PRNGKey(0)
    kx, kw, kb, k2, k3 = jax.random.split(key, 5)

    # Conv1d(1,1,1) has scalar weight & bias; BatchNorm1d(1) defaults gamma=1, beta=0.
    conv_w = float(jax.random.normal(kw, ()) * 0.5)
    conv_b = float(jax.random.normal(kb, ()) * 0.1)
    bn_gamma, bn_beta = 1.0, 0.0

    # 1) Module's own shape (N=3, C=1, L=16): ragged total -> natural layout, one block.
    x1 = jax.random.normal(kx, (3, 1, 16), dtype=jnp.float32)
    out1 = jax.block_until_ready(conv_bn_sigmoid(x1, conv_w, conv_b, bn_gamma, bn_beta))
    ref1 = _reference(x1, conv_w, conv_b, bn_gamma, bn_beta)
    assert out1.shape == (3, 1, 16)
    assert jnp.allclose(out1, ref1, atol=1e-5, rtol=1e-5)

    # 2) Lane-dense path (total % 128 == 0), single resident block (x read once).
    x2 = jax.random.normal(k2, (4, 1, 320), dtype=jnp.float32)
    out2 = jax.block_until_ready(conv_bn_sigmoid(x2, conv_w, conv_b, bn_gamma, bn_beta))
    ref2 = _reference(x2, conv_w, conv_b, bn_gamma, bn_beta)
    assert jnp.allclose(out2, ref2, atol=1e-5, rtol=1e-5)

    # 3) Force the multi-tile streaming path on small data (block_rows=8 -> 3 tiles,
    #    ragged last tile) to exercise accumulation, masking and the phase-1 writes.
    x3 = jax.random.normal(k3, (2, 1, 1280), dtype=jnp.float32)
    out3 = jax.block_until_ready(
        conv_bn_sigmoid(x3, conv_w, conv_b, bn_gamma, bn_beta, block_rows_override=8))
    ref3 = _reference(x3, conv_w, conv_b, bn_gamma, bn_beta)
    assert jnp.allclose(out3, ref3, atol=1e-5, rtol=1e-5)

    print("KERNEL_OK")
</pallas_src>

<mosaic_0001>
module attributes {stable_mosaic.version = 11 : i64} {
  func.func @kernel(%arg0: i32, %arg1: i32, %arg2: memref<5xf32, #tpu.memory_space<smem>>, %arg3: memref<3x16xf32, #tpu.memory_space<vmem>>, %arg4: memref<3x16xf32, #tpu.memory_space<vmem>>, %arg5: memref<1x16xf32, #tpu.memory_space<vmem>>, %arg6: memref<1x16xf32, #tpu.memory_space<vmem>>, %arg7: memref<1x16xf32, #tpu.memory_space<vmem>>, %arg8: memref<1x16xf32, #tpu.memory_space<vmem>>) attributes {dimension_semantics = [#tpu.dimension_semantics<arbitrary>, #tpu.dimension_semantics<arbitrary>], iteration_bounds = array<i64: 2, 1>, scalar_prefetch = 1 : i64, scratch_operands = 4 : i64, tpu.core_type = #tpu.core_type<tc>, window_params = [{transform_indices = @transform_0, window_bounds = array<i64: 3, 16>}, {transform_indices = @transform_1, window_bounds = array<i64: 3, 16>}]} {
    %c0_i32 = arith.constant 0 : i32
    %0 = arith.cmpi eq, %arg0, %c0_i32 : i32
    %c0_i32_0 = arith.constant 0 : i32
    %1 = arith.cmpi eq, %arg1, %c0_i32_0 : i32
    %2 = arith.andi %0, %1 : i1
    %3 = arith.extui %2 : i1 to i32
    %c0_i32_1 = arith.constant 0 : i32
    %4 = arith.cmpi ne, %3, %c0_i32_1 : i32
    scf.if %4 {
      %cst = arith.constant 0.000000e+00 : f32
      %16 = vector.broadcast %cst : f32 to vector<1x16xf32>
      %c0 = arith.constant 0 : index
      %c0_8 = arith.constant 0 : index
      %17 = vector.load %arg5[%c0, %c0_8] : memref<1x16xf32, #tpu.memory_space<vmem>>, vector<1x16xf32>
      tpu.vector_store %arg5[%c0, %c0_8], %16 {strides = array<i32>} : memref<1x16xf32, #tpu.memory_space<vmem>>, vector<1x16xf32>,
      %cst_9 = arith.constant 0.000000e+00 : f32
      %18 = vector.broadcast %cst_9 : f32 to vector<1x16xf32>
      %c0_10 = arith.constant 0 : index
      %c0_11 = arith.constant 0 : index
      %19 = vector.load %arg6[%c0_10, %c0_11] : memref<1x16xf32, #tpu.memory_space<vmem>>, vector<1x16xf32>
      tpu.vector_store %arg6[%c0_10, %c0_11], %18 {strides = array<i32>} : memref<1x16xf32, #tpu.memory_space<vmem>>, vector<1x16xf32>,
    } else {
    }
    %c0_i32_2 = arith.constant 0 : i32
    %5 = arith.cmpi eq, %arg0, %c0_i32_2 : i32
    %6 = arith.extui %5 : i1 to i32
    %c0_i32_3 = arith.constant 0 : i32
    %7 = arith.cmpi ne, %6, %c0_i32_3 : i32
    scf.if %7 {
      %c0 = arith.constant 0 : index
      %c0_8 = arith.constant 0 : index
      %16 = vector.load %arg3[%c0, %c0_8] : memref<3x16xf32, #tpu.memory_space<vmem>>, vector<3x16xf32>
      %c0_9 = arith.constant 0 : index
      %c0_10 = arith.constant 0 : index
      %17 = vector.load %arg5[%c0_9, %c0_10] : memref<1x16xf32, #tpu.memory_space<vmem>>, vector<1x16xf32>
      %cst = arith.constant dense<0.000000e+00> : vector<16xf32>
      %18 = vector.multi_reduction <add>, %16, %cst [0] : vector<3x16xf32> to vector<16xf32>
      %19 = vector.shape_cast %18 : vector<16xf32> to vector<1x16xf32>
      %20 = arith.addf %17, %19 : vector<1x16xf32>
      %c0_11 = arith.constant 0 : index
      %c0_12 = arith.constant 0 : index
      %21 = vector.load %arg5[%c0_11, %c0_12] : memref<1x16xf32, #tpu.memory_space<vmem>>, vector<1x16xf32>
      tpu.vector_store %arg5[%c0_11, %c0_12], %20 {strides = array<i32>} : memref<1x16xf32, #tpu.memory_space<vmem>>, vector<1x16xf32>,
      %c0_13 = arith.constant 0 : index
      %c0_14 = arith.constant 0 : index
      %22 = vector.load %arg6[%c0_13, %c0_14] : memref<1x16xf32, #tpu.memory_space<vmem>>, vector<1x16xf32>
      %23 = arith.mulf %16, %16 : vector<3x16xf32>
      %cst_15 = arith.constant dense<0.000000e+00> : vector<16xf32>
      %24 = vector.multi_reduction <add>, %23, %cst_15 [0] : vector<3x16xf32> to vector<16xf32>
      %25 = vector.shape_cast %24 : vector<16xf32> to vector<1x16xf32>
      %26 = arith.addf %22, %25 : vector<1x16xf32>
      %c0_16 = arith.constant 0 : index
      %c0_17 = arith.constant 0 : index
      %27 = vector.load %arg6[%c0_16, %c0_17] : memref<1x16xf32, #tpu.memory_space<vmem>>, vector<1x16xf32>
      tpu.vector_store %arg6[%c0_16, %c0_17], %26 {strides = array<i32>} : memref<1x16xf32, #tpu.memory_space<vmem>>, vector<1x16xf32>,
    } else {
    }
    %c1_i32 = arith.constant 1 : i32
    %8 = arith.cmpi eq, %arg0, %c1_i32 : i32
    %c0_i32_4 = arith.constant 0 : i32
    %9 = arith.cmpi eq, %arg1, %c0_i32_4 : i32
    %10 = arith.andi %8, %9 : i1
    %11 = arith.extui %10 : i1 to i32
    %c0_i32_5 = arith.constant 0 : i32
    %12 = arith.cmpi ne, %11, %c0_i32_5 : i32
    scf.if %12 {
      %c0 = arith.constant 0 : index
      %16 = memref.load %arg2[%c0] : memref<5xf32, #tpu.memory_space<smem>>
      %c1 = arith.constant 1 : index
      %17 = memref.load %arg2[%c1] : memref<5xf32, #tpu.memory_space<smem>>
      %c2 = arith.constant 2 : index
      %18 = memref.load %arg2[%c2] : memref<5xf32, #tpu.memory_space<smem>>
      %c3 = arith.constant 3 : index
      %19 = memref.load %arg2[%c3] : memref<5xf32, #tpu.memory_space<smem>>
      %c4 = arith.constant 4 : index
      %20 = memref.load %arg2[%c4] : memref<5xf32, #tpu.memory_space<smem>>
      %c0_8 = arith.constant 0 : index
      %c0_9 = arith.constant 0 : index
      %21 = vector.load %arg5[%c0_8, %c0_9] : memref<1x16xf32, #tpu.memory_space<vmem>>, vector<1x16xf32>
      %22 = vector.shape_cast %21 : vector<1x16xf32> to vector<1x1x16xf32>
      %cst = arith.constant dense<0.000000e+00> : vector<1xf32>
      %23 = vector.multi_reduction <add>, %22, %cst [1, 2] : vector<1x1x16xf32> to vector<1xf32>
      %24 = vector.shape_cast %23 : vector<1xf32> to vector<1x1x1xf32>
      %25 = vector.extract %24[0, 0, 0] : f32 from vector<1x1x1xf32>
      %26 = vector.broadcast %25 : f32 to vector<1x1xf32>
      %c0_10 = arith.constant 0 : index
      %c0_11 = arith.constant 0 : index
      %27 = vector.load %arg6[%c0_10, %c0_11] : memref<1x16xf32, #tpu.memory_space<vmem>>, vector<1x16xf32>
      %28 = vector.shape_cast %27 : vector<1x16xf32> to vector<1x1x16xf32>
      %cst_12 = arith.constant dense<0.000000e+00> : vector<1xf32>
      %29 = vector.multi_reduction <add>, %28, %cst_12 [1, 2] : vector<1x1x16xf32> to vector<1xf32>
      %30 = vector.shape_cast %29 : vector<1xf32> to vector<1x1x1xf32>
      %31 = vector.extract %30[0, 0, 0] : f32 from vector<1x1x1xf32>
      %32 = vector.broadcast %31 : f32 to vector<1x1xf32>
      %cst_13 = arith.constant 0.020833334 : f32
      %33 = vector.broadcast %cst_13 : f32 to vector<1x1xf32>
      %34 = arith.mulf %26, %33 : vector<1x1xf32>
      %cst_14 = arith.constant 0.020833334 : f32
      %35 = vector.broadcast %cst_14 : f32 to vector<1x1xf32>
      %36 = arith.mulf %32, %35 : vector<1x1xf32>
      %37 = arith.mulf %34, %34 : vector<1x1xf32>
      %38 = arith.subf %36, %37 : vector<1x1xf32>
      %cst_15 = arith.constant 0.000000e+00 : f32
      %39 = vector.broadcast %cst_15 : f32 to vector<1x1xf32>
      %40 = arith.maximumf %38, %39 : vector<1x1xf32>
      %41 = vector.broadcast %16 : f32 to vector<1x1xf32>
      %42 = arith.mulf %41, %34 : vector<1x1xf32>
      %43 = vector.broadcast %17 : f32 to vector<1x1xf32>
      %44 = arith.addf %42, %43 : vector<1x1xf32>
      %45 = arith.mulf %16, %16 : f32
      %46 = vector.broadcast %45 : f32 to vector<1x1xf32>
      %47 = arith.mulf %46, %40 : vector<1x1xf32>
      %48 = vector.broadcast %20 : f32 to vector<1x1xf32>
      %49 = arith.addf %47, %48 : vector<1x1xf32>
      %50 = math.rsqrt %49 : vector<1x1xf32>
      %51 = vector.broadcast %18 : f32 to vector<1x1xf32>
      %52 = arith.mulf %51, %50 : vector<1x1xf32>
      %53 = vector.broadcast %16 : f32 to vector<1x1xf32>
      %54 = arith.mulf %52, %53 : vector<1x1xf32>
      %55 = vector.broadcast %17 : f32 to vector<1x1xf32>
      %56 = arith.subf %55, %44 : vector<1x1xf32>
      %57 = arith.mulf %52, %56 : vector<1x1xf32>
      %58 = vector.broadcast %19 : f32 to vector<1x1xf32>
      %59 = arith.addf %57, %58 : vector<1x1xf32>
      %60 = vector.shape_cast %54 : vector<1x1xf32> to vector<1x1xf32>
      %61 = vector.broadcast %60 : vector<1x1xf32> to vector<1x16xf32>
      %c0_16 = arith.constant 0 : index
      %c0_17 = arith.constant 0 : index
      %62 = vector.load %arg7[%c0_16, %c0_17] : memref<1x16xf32, #tpu.memory_space<vmem>>, vector<1x16xf32>
      tpu.vector_store %arg7[%c0_16, %c0_17], %61 {strides = array<i32>} : memref<1x16xf32, #tpu.memory_space<vmem>>, vector<1x16xf32>,
      %63 = vector.shape_cast %59 : vector<1x1xf32> to vector<1x1xf32>
      %64 = vector.broadcast %63 : vector<1x1xf32> to vector<1x16xf32>
      %c0_18 = arith.constant 0 : index
      %c0_19 = arith.constant 0 : index
      %65 = vector.load %arg8[%c0_18, %c0_19] : memref<1x16xf32, #tpu.memory_space<vmem>>, vector<1x16xf32>
      tpu.vector_store %arg8[%c0_18, %c0_19], %64 {strides = array<i32>} : memref<1x16xf32, #tpu.memory_space<vmem>>, vector<1x16xf32>,
    } else {
    }
    %c1_i32_6 = arith.constant 1 : i32
    %13 = arith.cmpi eq, %arg0, %c1_i32_6 : i32
    %14 = arith.extui %13 : i1 to i32
    %c0_i32_7 = arith.constant 0 : i32
    %15 = arith.cmpi ne, %14, %c0_i32_7 : i32
    scf.if %15 {
      %c0 = arith.constant 0 : index
      %c0_8 = arith.constant 0 : index
      %16 = vector.load %arg7[%c0, %c0_8] : memref<1x16xf32, #tpu.memory_space<vmem>>, vector<1x16xf32>
      %c0_9 = arith.constant 0 : index
      %c0_10 = arith.constant 0 : index
      %17 = vector.load %arg3[%c0_9, %c0_10] : memref<3x16xf32, #tpu.memory_space<vmem>>, vector<3x16xf32>
      %18 = vector.broadcast %16 : vector<1x16xf32> to vector<3x16xf32>
      %19 = arith.mulf %18, %17 : vector<3x16xf32>
      %c0_11 = arith.constant 0 : index
      %c0_12 = arith.constant 0 : index
      %20 = vector.load %arg8[%c0_11, %c0_12] : memref<1x16xf32, #tpu.memory_space<vmem>>, vector<1x16xf32>
      %21 = vector.broadcast %20 : vector<1x16xf32> to vector<3x16xf32>
      %22 = arith.addf %19, %21 : vector<3x16xf32>
      %cst = arith.constant 5.000000e-01 : f32
      %23 = vector.broadcast %cst : f32 to vector<3x16xf32>
      %24 = arith.mulf %23, %22 : vector<3x16xf32>
      %25 = math.tanh %24 : vector<3x16xf32>
      %cst_13 = arith.constant 1.000000e+00 : f32
      %26 = vector.broadcast %cst_13 : f32 to vector<3x16xf32>
      %27 = arith.addf %25, %26 : vector<3x16xf32>
      %cst_14 = arith.constant 5.000000e-01 : f32
      %28 = vector.broadcast %cst_14 : f32 to vector<3x16xf32>
      %29 = arith.mulf %28, %27 : vector<3x16xf32>
      %c0_15 = arith.constant 0 : index
      %c0_16 = arith.constant 0 : index
      %30 = vector.load %arg4[%c0_15, %c0_16] : memref<3x16xf32, #tpu.memory_space<vmem>>, vector<3x16xf32>
      tpu.vector_store %arg4[%c0_15, %c0_16], %29 {strides = array<i32>} : memref<3x16xf32, #tpu.memory_space<vmem>>, vector<3x16xf32>,
    } else {
    }
    return
  }
  func.func @transform_0(%arg0: i32, %arg1: i32, %arg2: memref<5xf32, #tpu.memory_space<smem>>) -> (i32, i32) {
    %c0_i32 = arith.constant 0 : i32
    %c0_i32_0 = arith.constant 0 : i32
    return %arg1, %c0_i32 : i32, i32
  }
  func.func @transform_1(%arg0: i32, %arg1: i32, %arg2: memref<5xf32, #tpu.memory_space<smem>>) -> (i32, i32) {
    %0 = arith.muli %arg1, %arg0 : i32
    %c0_i32 = arith.constant 0 : i32
    %c0_i32_0 = arith.constant 0 : i32
    return %0, %c0_i32 : i32, i32
  }
}

</mosaic_0001>

<llo_original>
// kernel: conv_bn_sigmoid.1
$region0: #{conv_bn_sigmoid.1}
  #allocation0 [shape = 'u32[]', space=smem, size = 0x4, offset = 0x4, fixed_abs, tag = 'smem constant byte address 0x4 - core index']
  #allocation1 [shape = 'u32[144,128]{1,0:T(1,128)}', space=vmem, size = 0x12000, scoped, tag = 'internal scratch']
  #allocation2 [shape = 'f32[1,16]{1,0:T(1,128)}', space=vmem, size = 0x200, scoped, tag = 'scratch operand']
  #allocation3 [shape = 'f32[1,16]{1,0:T(1,128)}', space=vmem, size = 0x200, scoped, tag = 'scratch operand']
  #allocation4 [shape = 'f32[1,16]{1,0:T(1,128)}', space=vmem, size = 0x200, scoped, tag = 'scratch operand']
  #allocation5 [shape = 'f32[1,16]{1,0:T(1,128)}', space=vmem, size = 0x200, scoped, tag = 'scratch operand']
  #allocation6 [shape = 's32[1]{0}', space=sflag, size = 0x4, scoped, tag = 'scoped memory for conv_bn_sigmoid.1']
  #allocation7 [shape = 'u8[512]{0}', space=smem, size = 0x200, scoped, tag = 'prefetched SMEM operand 0']
  %s0 = inlined_call_operand.vmem [shape: f32[5], index: 0, kind: input, shape index: {}]
  %s1 = inlined_call_operand.vmem [shape: f32[3,16], index: 1, kind: input, shape index: {}]
  %s2 = inlined_call_operand.vmem [shape: f32[3,16], index: 2, kind: output, shape index: {}]
  %s3 = sld [smem:[#allocation0]]
  $region53: #{conv_bn_sigmoid.1} parent=0
    _
  %s5 = ssub.s32 1, %s3
  %s6 = scalar_select 0, %s5, %s3
  %s7 = sshll.u32 %s0, 4
  %s8 = int_to_ptr.vmem [resolvable:$true] %s7
  %10 = dma.vmem_to_smem %s8, 16, [#allocation7], [#allocation6]
  %11 = dma.done [#allocation6], 16
  %12 = sfence
  loop: start=0, step=1, limit=4
  $region2: #{conv_bn_sigmoid.1} parent=0 // loop_pre_header
    _
  $region3: #{conv_bn_sigmoid.1} parent=0 // loop_header
    %s14 = sphi 0, %s18
    %p15 = scmp.ge.s32.totalorder %s14, 4
    %s21 = sphi 0, %s33
    %s22 = sphi 0, %s29
    %s23 = sphi 0, %s21
    %s24 = sphi 0, %s22
    %s25 = sphi 0, %s23
    %s26 = sphi 0, %s24
    %s36 = sphi 0, %s38
    %s39 = sphi 0, %s36
    %s40 = sphi 0, %s39
    %s56 = sphi 0, %s40
    %s64 = sphi 0, %s66
    %s67 = sphi 0, %s64
    %s68 = sphi 0, %s67
    %s84 = sphi 0, %s68
  $region4: #{conv_bn_sigmoid.1} parent=0 // loop_header_branch
    %17 = sbr.rel (%p15) target = $region8
  $region5: #{conv_bn_sigmoid.1} parent=0 // loop_body
    %s19 = ssub.s32 %s14, 1
    %s20 = ssub.s32 %s14, 2
    %s27 = sadd.s32 1, %s22
    %p28 = scmp.ge.s32.totalorder %s27, 1
    %s29 = scalar_select %p28, 0, %s27
    %s30 = sadd.s32 1, %s21
    %s31 = scalar_select %p28, %s30, %s21
    %p32 = scmp.ge.s32.totalorder %s31, 2
    %s33 = scalar_select %p32, 0, %s31
    %s34 = ssub.s32 %s22, %s29
    %p35 = scmp.eq.s32.totalorder %s34, 0
    %s37 = sadd.s32 %s36, 1
    %s38 = scalar_select %p35, %s36, %s37
    %p41 = pneg %p35
    %p42 = scmp.eq.s32.totalorder %s14, 1
    %p43 = por %p41, %p42
    %p44 = scmp.ne.s32.totalorder %s36, %s39
    %p45 = scmp.eq.s32.totalorder %s14, 0
    %p46 = por %p44, %p45
    %p47 = scmp.ne.s32.totalorder %s36, %s39
    %p48 = scmp.eq.s32.totalorder %s19, 1
    %p49 = por %p47, %p48
    %p50 = scmp.ne.s32.totalorder %s39, %s40
    %p51 = scmp.eq.s32.totalorder %s19, 0
    %p52 = por %p50, %p51
    %p53 = scmp.ne.s32.totalorder %s39, %s40
    %p54 = scmp.eq.s32.totalorder %s20, 1
    %p55 = por %p53, %p54
    %p57 = scmp.ne.s32.totalorder %s40, %s56
    %p58 = scmp.eq.s32.totalorder %s20, 0
    %p59 = por %p57, %p58
    %s60 = smul.u32 %s22, %s21
    %s61 = smul.u32 %s29, %s33
    %s62 = ssub.s32 %s60, %s61
    %p63 = scmp.eq.s32.totalorder %s62, 0
    %s65 = sadd.s32 %s64, 1
    %s66 = scalar_select %p63, %s64, %s65
    %p69 = pneg %p63
    %p70 = scmp.eq.s32.totalorder %s14, 1
    %p71 = por %p69, %p70
    %p72 = scmp.ne.s32.totalorder %s64, %s67
    %p73 = scmp.eq.s32.totalorder %s14, 0
    %p74 = por %p72, %p73
    %p75 = scmp.ne.s32.totalorder %s64, %s67
    %p76 = scmp.eq.s32.totalorder %s19, 1
    %p77 = por %p75, %p76
    %p78 = scmp.ne.s32.totalorder %s67, %s68
    %p79 = scmp.eq.s32.totalorder %s19, 0
    %p80 = por %p78, %p79
    %p81 = scmp.ne.s32.totalorder %s67, %s68
    %p82 = scmp.eq.s32.totalorder %s20, 1
    %p83 = por %p81, %p82
    %p85 = scmp.ne.s32.totalorder %s68, %s84
    %p86 = scmp.eq.s32.totalorder %s20, 0
    %p87 = por %p85, %p86
    %p88 = scmp.le.s32.totalorder 1, %s14
    %p89 = scmp.lt.s32.totalorder %s14, 3
    %p90 = pnand %p88, %p89
    %p91 = pneg %p90
    // Predicated region
    $region9: #{conv_bn_sigmoid.1} parent=5 // pred_check
      _
    $region10: #{conv_bn_sigmoid.1} parent=5 // pred_check_branch
      %93 = sbr.rel (%p90) target = $region12
    $region11: #{conv_bn_sigmoid.1} parent=5 // pred_region
      %s94 = ssub.s32 %s14, 1
      // Predicated region
      $region13: #{conv_bn_sigmoid.1} parent=11 // pred_check
        %p95 = pneg %p52
      $region14: #{conv_bn_sigmoid.1} parent=11 // pred_check_branch
        %97 = sbr.rel (%p95) target = $region16
      $region15: #{conv_bn_sigmoid.1} parent=11 // pred_region
        %p98 = scmp.lt.s32.totalorder %s24, 0
        %s99 = scalar_select %p98, %s24, 0
        %s100 = smul.addr %s99, 4
        %s101 = scalar_lea.vmem %s1, %s100
      $region16: #{conv_bn_sigmoid.1} parent=11 // pred_fallthru
        _
    $region12: #{conv_bn_sigmoid.1} parent=5 // pred_fallthru
      _
    %p102 = scmp.lt.s32.totalorder %s14, 2
    // Predicated region
    $region17: #{conv_bn_sigmoid.1} parent=5 // pred_check
      %p103 = pneg %p102
    $region18: #{conv_bn_sigmoid.1} parent=5 // pred_check_branch
      %105 = sbr.rel (%p103) target = $region20
    $region19: #{conv_bn_sigmoid.1} parent=5 // pred_region
      _
    $region20: #{conv_bn_sigmoid.1} parent=5 // pred_fallthru
      _
    %p106 = scmp.le.s32.totalorder 1, %s14
    %p107 = scmp.lt.s32.totalorder %s14, 3
    %p108 = pnand %p106, %p107
    %p109 = pneg %p108
    // Predicated region
    $region21: #{conv_bn_sigmoid.1} parent=5 // pred_check
      _
    $region22: #{conv_bn_sigmoid.1} parent=5 // pred_check_branch
      %111 = sbr.rel (%p108) target = $region24
    $region23: #{conv_bn_sigmoid.1} parent=5 // pred_region
      %s112 = ssub.s32 %s14, 1
      %p113 = scmp.lt.s32.totalorder %s24, 0
      %s114 = scalar_select %p113, %s24, 0
      %s115 = smul.addr %s114, 4
      %s116 = scalar_lea.vmem %s1, %s115
      %p117 = pneg %p52
      %p118 = pneg %p49
      %p119 = pneg %p80
      %p120 = pneg %p77
      %s121 = smul.u32 %s24, %s23
      %p122 = scmp.lt.s32.totalorder %s121, 0
      %s123 = scalar_select %p122, %s121, 0
      %s124 = smul.addr %s123, 4
      %s125 = scalar_lea.vmem %s2, %s124
      %p126 = scmp.lt.s32.totalorder %s24, 0
      %s127 = scalar_select %p126, %s24, 0
      %s128 = smul.addr %s127, 4
      %s129 = scalar_lea.vmem %s1, %s128
      %s130 = smul.u32 %s24, %s23
      %p131 = scmp.lt.s32.totalorder %s130, 0
      %s132 = scalar_select %p131, %s130, 0
      %s133 = smul.addr %s132, 4
      %s134 = scalar_lea.vmem %s2, %s133
      %s135 = smul.u32 %s24, %s23
      %p136 = scmp.eq.s32.totalorder %s23, 0
      %p137 = scmp.eq.s32.totalorder %s24, 0
      %p138 = pnand %p136, %p137
      %p139 = pneg %p138
      // Predicated region
      $region25: #{conv_bn_sigmoid.1} parent=23 // pred_check
        _
      $region26: #{conv_bn_sigmoid.1} parent=23 // pred_check_branch
        %141 = sbr.rel (%p138) target = $region28
      $region27: #{conv_bn_sigmoid.1} parent=23 // pred_region
        %vm142 = vcmask 122880
        %143 = vst.msk [vmem:[#allocation2] sm:$0x1] %vm142, 0.0
        %144 = vst.msk [vmem:[#allocation3] sm:$0x1] %vm142, 0.0
      $region28: #{conv_bn_sigmoid.1} parent=23 // pred_fallthru
        _
      // Predicated region
      $region29: #{conv_bn_sigmoid.1} parent=23 // pred_check
        %p145 = pneg %p136
      $region30: #{conv_bn_sigmoid.1} parent=23 // pred_check_branch
        %147 = sbr.rel (%p145) target = $region32
      $region31: #{conv_bn_sigmoid.1} parent=23 // pred_region
        %v148 = vld [vmem:[%s129] sm:$0x7]
        %v149 = vld [vmem:[#allocation2] sm:$0x1]
        %vm150 = vcmask 124928
        %v151 = vsel %vm150, %v148, 0.0
        %v152 = vrot.slane %v151, 4
        %v153 = vadd.f32 %v151, %v152
        %v154 = vrot.slane %v153, 2
        %v155 = vadd.f32 %v153, %v154
        %v156 = vrot.slane %v155, 1
        %v157 = vadd.f32 %v155, %v156
        %v158 = vadd.f32 %v149, %v157
        %vm159 = vcmask 122880
        %160 = vst.msk [vmem:[#allocation2] sm:$0x1] %vm159, %v158
        %v161 = vld [vmem:[#allocation3] sm:$0x1]
        %v162 = vmul.f32 %v148, %v148
        %v163 = vsel %vm150, %v162, 0.0
        %v164 = vrot.slane %v163, 4
        %v165 = vadd.f32 %v163, %v164
        %v166 = vrot.slane %v165, 2
        %v167 = vadd.f32 %v165, %v166
        %v168 = vrot.slane %v167, 1
        %v169 = vadd.f32 %v167, %v168
        %v170 = vadd.f32 %v161, %v169
        %171 = vst.msk [vmem:[#allocation3] sm:$0x1] %vm159, %v170
      $region32: #{conv_bn_sigmoid.1} parent=23 // pred_fallthru
        _
      %p172 = scmp.eq.s32.totalorder %s23, 1
      %p173 = pnand %p172, %p137
      %p174 = pneg %p173
      // Predicated region
      $region33: #{conv_bn_sigmoid.1} parent=23 // pred_check
        _
      $region34: #{conv_bn_sigmoid.1} parent=23 // pred_check_branch
        %176 = sbr.rel (%p173) target = $region36
      $region35: #{conv_bn_sigmoid.1} parent=23 // pred_region
        %s177 = sld [smem:[#allocation7]]
        %s178 = sld [smem:[#allocation7 + $0x1]]
        %s179 = sld [smem:[#allocation7 + $0x2]]
        %s180 = sld [smem:[#allocation7 + $0x3]]
        %s181 = sld [smem:[#allocation7 + $0x4]]
        %v182 = vld [vmem:[#allocation2] sm:$0x1]
        %vm183 = vcmask 122880
        %v184 = vsel %vm183, %v182, 0.0
        %185 = vadd.xlane.f32.xlu0 %v184
        %v186 = vpop.xlane.xlu0 %185
        %v187 = vrot.slane %v186, 4
        %v188 = vadd.f32 %v186, %v187
        %v189 = vrot.slane %v188, 2
        %v190 = vadd.f32 %v188, %v189
        %v191 = vrot.slane %v190, 1
        %v192 = vadd.f32 %v190, %v191
        %s193 = vtos %v192
        %v194 = vstv %s193
        %v195 = vld [vmem:[#allocation3] sm:$0x1]
        %v196 = vsel %vm183, %v195, 0.0
        %197 = vadd.xlane.f32.xlu0 %v196
        %v198 = vpop.xlane.xlu0 %197
        %v199 = vrot.slane %v198, 4
        %v200 = vadd.f32 %v198, %v199
        %v201 = vrot.slane %v200, 2
        %v202 = vadd.f32 %v200, %v201
        %v203 = vrot.slane %v202, 1
        %v204 = vadd.f32 %v202, %v203
        %s205 = vtos %v204
        %v206 = vstv %s205
        %v207 = vmul.f32 %v194, 0.020833334
        %v208 = vmul.f32 %v206, 0.020833334
        %v209 = vmul.f32 %v207, %v207
        %v210 = vsub.f32 %v208, %v209
        %v211 = vmax.f32 %v210, 0.0
        %v212 = vstv %s177
        %v213 = vmul.f32 %v212, %v207
        %v214 = vstv %s178
        %v215 = vadd.f32 %v213, %v214
        %s216 = smul.f32 %s177, %s177
        %v217 = vstv %s216
        %v218 = vmul.f32 %v217, %v211
        %v219 = vstv %s181
        %v220 = vadd.f32 %v218, %v219
        %v221 = vrsqrt.pop %v220
        %v222 = vstv %s179
        %v223 = vmul.f32 %v222, %v221
        %v224 = vmul.f32 %v223, %v212
        %v225 = vsub.f32 %v214, %v215
        %v226 = vmul.f32 %v223, %v225
        %v227 = vstv %s180
        %v228 = vadd.f32 %v226, %v227
        %229 = vst.msk [vmem:[#allocation4] sm:$0x1] %vm183, %v224
        %230 = vst.msk [vmem:[#allocation5] sm:$0x1] %vm183, %v228
      $region36: #{conv_bn_sigmoid.1} parent=23 // pred_fallthru
        _
      // Predicated region
      $region37: #{conv_bn_sigmoid.1} parent=23 // pred_check
        %p231 = pneg %p172
      $region38: #{conv_bn_sigmoid.1} parent=23 // pred_check_branch
        %233 = sbr.rel (%p231) target = $region40
      $region39: #{conv_bn_sigmoid.1} parent=23 // pred_region
        %v234 = vld [vmem:[#allocation4] sm:$0x1]
        %v235 = vld [vmem:[%s129] sm:$0x7]
        %v237 = vlaneseq
        %v238 = vshrl.u32 %v237, 7
        %v239 = vsub.s32 0, %v238
        %v240 = vrot.slane %v234, %v239
        %v242 = vmul.f32 %v240, %v235
        %v243 = vld [vmem:[#allocation5] sm:$0x1]
        %v245 = vlaneseq
        %v246 = vshrl.u32 %v245, 7
        %v247 = vsub.s32 0, %v246
        %v248 = vrot.slane %v243, %v247
        %v250 = vadd.f32 %v242, %v248
        %v251 = vmul.f32 %v250, 0.5
        %v252 = vtanh.pop %v251
        %v253 = vadd.f32 %v252, 1.0
        %v254 = vmul.f32 %v253, 0.5
        %vm255 = vcmask 124928
        %256 = vst.msk [vmem:[%s134] sm:$0x7] %vm255, %v254
      $region40: #{conv_bn_sigmoid.1} parent=23 // pred_fallthru
        _
      %s257 = smul.u32 %s24, %s23
      %p258 = scmp.lt.s32.totalorder %s257, 0
      %s259 = scalar_select %p258, %s257, 0
      %s260 = smul.addr %s259, 4
      %s261 = scalar_lea.vmem %s2, %s260
      // Predicated region
      $region41: #{conv_bn_sigmoid.1} parent=23 // pred_check
        %p262 = pneg %p77
      $region42: #{conv_bn_sigmoid.1} parent=23 // pred_check_branch
        %264 = sbr.rel (%p262) target = $region44
      $region43: #{conv_bn_sigmoid.1} parent=23 // pred_region
        %s265 = smul.u32 %s24, %s23
      $region44: #{conv_bn_sigmoid.1} parent=23 // pred_fallthru
        _
    $region24: #{conv_bn_sigmoid.1} parent=5 // pred_fallthru
      _
    %p266 = scmp.le.s32.totalorder 2, %s14
    // Predicated region
    $region45: #{conv_bn_sigmoid.1} parent=5 // pred_check
      %p267 = pneg %p266
    $region46: #{conv_bn_sigmoid.1} parent=5 // pred_check_branch
      %269 = sbr.rel (%p267) target = $region48
    $region47: #{conv_bn_sigmoid.1} parent=5 // pred_region
      %s270 = ssub.s32 %s14, 2
      // Predicated region
      $region49: #{conv_bn_sigmoid.1} parent=47 // pred_check
        %p271 = pneg %p83
      $region50: #{conv_bn_sigmoid.1} parent=47 // pred_check_branch
        %273 = sbr.rel (%p271) target = $region52
      $region51: #{conv_bn_sigmoid.1} parent=47 // pred_region
        %s274 = smul.u32 %s26, %s25
        %p275 = scmp.lt.s32.totalorder %s274, 0
        %s276 = scalar_select %p275, %s274, 0
        %s277 = smul.addr %s276, 4
        %s278 = scalar_lea.vmem %s2, %s277
      $region52: #{conv_bn_sigmoid.1} parent=47 // pred_fallthru
        _
    $region48: #{conv_bn_sigmoid.1} parent=5 // pred_fallthru
      _
  $region6: #{conv_bn_sigmoid.1} parent=0 // loop_footer
    %s18 = sadd.s32 1, %s14
  $region7: #{conv_bn_sigmoid.1} parent=0 // loop_footer_branch
    %13 = sbr.rel target = $region3
  $region8: #{conv_bn_sigmoid.1} parent=0 // loop_exit
    _

</llo_original>
